<compile_context>
chip_gen: v7x
topology: tpu7x:2x2x1
jax: 0.10.0
libtpu: 0.0.40
codegen_flags: <defaults>
</compile_context>

<pallas_src>
import functools

import jax
import jax.numpy as jnp
from jax.experimental import pallas as pl
from jax.experimental.pallas import tpu as pltpu


def _round_up(x, m):
    return (x + m - 1) // m * m


def encoder_head_kernel(x_ref, w_ref, b_ref, o_ref, acc_ref, *, hw):
    """One (batch-tile, C-tile) grid step of: mean_HW(x) @ W^T + b.

    x_ref  : (TB*HW, TC)  feature maps, lane-dense on C
    w_ref  : (TC, EP)     embed.weight.T / HW (mean scale folded in), zero-padded
    b_ref  : (1, EP)      bias, zero-padded to EP lanes
    o_ref  : (TB, EP)     output block (resident across the C reduction axis)
    acc_ref: (TB*HW, EP)  f32 accumulator scratch
    """
    k = pl.program_id(1)

    @pl.when(k == 0)
    def _():
        acc_ref[...] = jnp.zeros_like(acc_ref)

    # Pool-via-matmul: all heavy work on the MXU with M = TB*HW (not just TB).
    acc_ref[...] += jnp.dot(x_ref[...], w_ref[...],
                            preferred_element_type=jnp.float32)

    @pl.when(k == pl.num_programs(1) - 1)
    def _():
        tbhw, ep = acc_ref.shape
        tb = tbhw // hw
        # Tiny (TB, HW, EP) sublane reduce finishes the spatial mean
        # (the 1/HW scale is already folded into w_ref).
        pooled = acc_ref[...].reshape(tb, hw, ep).sum(axis=1)          # (TB, EP)
        o_ref[...] = (pooled + b_ref[...]).astype(o_ref.dtype)


def encoder_cnn_head(feature_maps, embed_weight, embed_bias):
    """features = Linear(AdaptiveAvgPool2d(1)(feature_maps).flatten(1)).

    feature_maps: (B, C, H, W) NCHW backbone output
    embed_weight: (E, C)   (= nn.Linear(in_features=C, out_features=E).weight)
    embed_bias  : (E,)
    """
    B, C, H, W = feature_maps.shape
    E = embed_weight.shape[0]
    HW = H * W
    EP = _round_up(E, 128)                      # lane-dense output block

    # Glue-side re-layout: C (multiple of 128) into the lane dim, flatten B*HW.
    x2d = jnp.transpose(feature_maps, (0, 2, 3, 1)).reshape(B * HW, C)
    x2d = x2d.astype(jnp.float32)

    # Fold the 1/HW mean scale into the weight; pad weight/bias to EP lanes.
    w_t = (embed_weight.T.astype(jnp.float32) / jnp.float32(HW))       # (C, E)
    w_t = jnp.pad(w_t, ((0, 0), (0, EP - E)))                          # (C, EP)
    b2d = jnp.pad(embed_bias.astype(jnp.float32).reshape(1, E),
                  ((0, 0), (0, EP - E)))                               # (1, EP)

    # Tile sizes: small enough for v7x's 64 MiB VMEM (double-buffered),
    # big enough (>= 512 lanes on the C reduction) to approach HBM roofline.
    TB = B if B <= 8 else 8
    assert B % TB == 0, "batch must be divisible by the batch tile"
    if C % 512 == 0:
        TC = 512
    elif C % 256 == 0:
        TC = 256
    else:
        TC = C

    grid = (B // TB, C // TC)
    kernel = functools.partial(encoder_head_kernel, hw=HW)

    out_padded = pl.pallas_call(
        kernel,
        out_shape=jax.ShapeDtypeStruct((B, EP), jnp.float32),
        grid_spec=pltpu.PrefetchScalarGridSpec(
            num_scalar_prefetch=0,
            grid=grid,
            in_specs=[
                pl.BlockSpec((TB * HW, TC), lambda i, k: (i, k)),   # x
                pl.BlockSpec((TC, EP), lambda i, k: (k, 0)),        # W^T / HW
                pl.BlockSpec((1, EP), lambda i, k: (0, 0)),         # bias
            ],
            out_specs=pl.BlockSpec((TB, EP), lambda i, k: (i, 0)),
            scratch_shapes=[pltpu.VMEM((TB * HW, EP), jnp.float32)],
        ),
        compiler_params=pltpu.CompilerParams(
            dimension_semantics=("parallel", "arbitrary"),
            vmem_limit_bytes=32 * 1024 * 1024,
        ),
    )(x2d, w_t, b2d)

    return out_padded[:, :E]


if __name__ == "__main__":
    # Small but semantically consistent shapes:
    #   ResNet-50 final feature maps have C = resnet.fc.in_features = 2048;
    #   spatial kept small (4x4), batch = 2, embed_size = 32.
    B, C, H, W = 2, 2048, 4, 4
    embed_size = 32

    key = jax.random.PRNGKey(0)
    k_x, k_w, k_b = jax.random.split(key, 3)
    feature_maps = jax.random.normal(k_x, (B, C, H, W), dtype=jnp.float32)
    # Deterministic synthetic parameters for self.embed = nn.Linear(2048, embed_size).
    embed_weight = jax.random.normal(k_w, (embed_size, C), dtype=jnp.float32) * 0.02
    embed_bias = jax.random.normal(k_b, (embed_size,), dtype=jnp.float32) * 0.02

    out = encoder_cnn_head(feature_maps, embed_weight, embed_bias)
    out = jax.block_until_ready(out)

    # Pure-JAX reference for the same head computation.
    ref_pooled = feature_maps.mean(axis=(2, 3))                  # (B, C)
    ref = ref_pooled @ embed_weight.T + embed_bias               # (B, E)
    assert out.shape == (B, embed_size)
    assert jnp.allclose(out, ref, atol=1e-3, rtol=1e-3)

    print("KERNEL_OK")
</pallas_src>

<mosaic_0001>
module attributes {stable_mosaic.version = 11 : i64} {
  func.func @encoder_head_kernel(%arg0: i32, %arg1: i32, %arg2: memref<32x512xf32, #tpu.memory_space<vmem>>, %arg3: memref<512x128xf32, #tpu.memory_space<vmem>>, %arg4: memref<1x128xf32, #tpu.memory_space<vmem>>, %arg5: memref<2x128xf32, #tpu.memory_space<vmem>>, %arg6: memref<32x128xf32, #tpu.memory_space<vmem>>) attributes {dimension_semantics = [#tpu.dimension_semantics<parallel>, #tpu.dimension_semantics<arbitrary>], iteration_bounds = array<i64: 1, 4>, scalar_prefetch = 0 : i64, scratch_operands = 1 : i64, tpu.core_type = #tpu.core_type<tc>, window_params = [{transform_indices = @transform_0, window_bounds = array<i64: 32, 512>}, {transform_indices = @transform_1, window_bounds = array<i64: 512, 128>}, {pipeline_mode = #tpu.pipeline_mode<synchronous>, transform_indices = @transform_2, window_bounds = array<i64: 1, 128>}, {transform_indices = @transform_3, window_bounds = array<i64: 2, 128>}]} {
    %c0_i32 = arith.constant 0 : i32
    %0 = arith.cmpi eq, %arg1, %c0_i32 : i32
    %1 = arith.extui %0 : i1 to i32
    %c0_i32_0 = arith.constant 0 : i32
    %2 = arith.cmpi ne, %1, %c0_i32_0 : i32
    scf.if %2 {
      %cst_9 = arith.constant 0.000000e+00 : f32
      %12 = vector.broadcast %cst_9 : f32 to vector<32x128xf32>
      %c0_10 = arith.constant 0 : index
      %c0_11 = arith.constant 0 : index
      %13 = vector.load %arg6[%c0_10, %c0_11] : memref<32x128xf32, #tpu.memory_space<vmem>>, vector<32x128xf32>
      tpu.vector_store %arg6[%c0_10, %c0_11], %12 {strides = array<i32>} : memref<32x128xf32, #tpu.memory_space<vmem>>, vector<32x128xf32>,
    } else {
    }
    %c0 = arith.constant 0 : index
    %c0_1 = arith.constant 0 : index
    %3 = vector.load %arg6[%c0, %c0_1] : memref<32x128xf32, #tpu.memory_space<vmem>>, vector<32x128xf32>
    %c0_2 = arith.constant 0 : index
    %c0_3 = arith.constant 0 : index
    %4 = vector.load %arg2[%c0_2, %c0_3] : memref<32x512xf32, #tpu.memory_space<vmem>>, vector<32x512xf32>
    %c0_4 = arith.constant 0 : index
    %c0_5 = arith.constant 0 : index
    %5 = vector.load %arg3[%c0_4, %c0_5] : memref<512x128xf32, #tpu.memory_space<vmem>>, vector<512x128xf32>
    %cst = arith.constant dense<0.000000e+00> : vector<32x128xf32>
    %6 = tpu.matmul %4, %5, %cst {dimension_numbers = #tpu.dot_dimension_numbers<[1], [0], [0], [1], [0, 0, 1, 1], [], []>} : vector<32x512xf32>, vector<512x128xf32>, vector<32x128xf32> -> vector<32x128xf32>
    %7 = arith.addf %3, %6 : vector<32x128xf32>
    %c0_6 = arith.constant 0 : index
    %c0_7 = arith.constant 0 : index
    %8 = vector.load %arg6[%c0_6, %c0_7] : memref<32x128xf32, #tpu.memory_space<vmem>>, vector<32x128xf32>
    tpu.vector_store %arg6[%c0_6, %c0_7], %7 {strides = array<i32>} : memref<32x128xf32, #tpu.memory_space<vmem>>, vector<32x128xf32>,
    %c3_i32 = arith.constant 3 : i32
    %9 = arith.cmpi eq, %arg1, %c3_i32 : i32
    %10 = arith.extui %9 : i1 to i32
    %c0_i32_8 = arith.constant 0 : i32
    %11 = arith.cmpi ne, %10, %c0_i32_8 : i32
    scf.if %11 {
      %c0_9 = arith.constant 0 : index
      %c0_10 = arith.constant 0 : index
      %12 = vector.load %arg6[%c0_9, %c0_10] : memref<32x128xf32, #tpu.memory_space<vmem>>, vector<32x128xf32>
      %13 = vector.shape_cast %12 : vector<32x128xf32> to vector<2x16x128xf32>
      %cst_11 = arith.constant dense<0.000000e+00> : vector<2x128xf32>
      %14 = vector.multi_reduction <add>, %13, %cst_11 [1] : vector<2x16x128xf32> to vector<2x128xf32>
      %c0_12 = arith.constant 0 : index
      %c0_13 = arith.constant 0 : index
      %15 = vector.load %arg4[%c0_12, %c0_13] : memref<1x128xf32, #tpu.memory_space<vmem>>, vector<1x128xf32>
      %16 = vector.broadcast %15 : vector<1x128xf32> to vector<2x128xf32>
      %17 = arith.addf %14, %16 : vector<2x128xf32>
      %c0_14 = arith.constant 0 : index
      %c0_15 = arith.constant 0 : index
      %18 = vector.load %arg5[%c0_14, %c0_15] : memref<2x128xf32, #tpu.memory_space<vmem>>, vector<2x128xf32>
      tpu.vector_store %arg5[%c0_14, %c0_15], %17 {strides = array<i32>} : memref<2x128xf32, #tpu.memory_space<vmem>>, vector<2x128xf32>,
    } else {
    }
    return
  }
  func.func @transform_0(%arg0: i32, %arg1: i32) -> (i32, i32) {
    %c0_i32 = arith.constant 0 : i32
    return %arg0, %arg1 : i32, i32
  }
  func.func @transform_1(%arg0: i32, %arg1: i32) -> (i32, i32) {
    %c0_i32 = arith.constant 0 : i32
    %c0_i32_0 = arith.constant 0 : i32
    return %arg1, %c0_i32 : i32, i32
  }
  func.func @transform_2(%arg0: i32, %arg1: i32) -> (i32, i32) {
    %c0_i32 = arith.constant 0 : i32
    %c0_i32_0 = arith.constant 0 : i32
    %c0_i32_1 = arith.constant 0 : i32
    return %c0_i32, %c0_i32_0 : i32, i32
  }
  func.func @transform_3(%arg0: i32, %arg1: i32) -> (i32, i32) {
    %c0_i32 = arith.constant 0 : i32
    %c0_i32_0 = arith.constant 0 : i32
    return %arg0, %c0_i32 : i32, i32
  }
}

</mosaic_0001>

<llo_original>
// kernel: tpu_custom_call.1
$region0: #{tpu_custom_call.1}
  #allocation0 [shape = 'u32[]', space=smem, size = 0x4, offset = 0x4, fixed_abs, tag = 'smem constant byte address 0x4 - core index']
  #allocation1 [shape = 'u32[144,128]{1,0:T(1,128)}', space=vmem, size = 0x12000, scoped, tag = 'internal scratch']
  #allocation2 [shape = 'f32[32,128]{1,0:T(8,128)}', space=vmem, size = 0x4000, scoped, tag = 'scratch operand']
  %s0 = inlined_call_operand.hbm [shape: f32[32,2048], index: 0, kind: input, shape index: {}]
  %s1 = inlined_call_operand.hbm [shape: f32[2048,128], index: 1, kind: input, shape index: {}]
  %s2 = inlined_call_operand.vmem [shape: f32[1,128], index: 2, kind: input, shape index: {}]
  %s3 = inlined_call_operand.hbm [shape: f32[2,128], index: 3, kind: output, shape index: {}]
  %s4 = sld [smem:[#allocation0]]
  $region61: #{tpu_custom_call.1} parent=0
    _
  %s6 = ssub.s32 1, %s4
  %s7 = scalar_select 0, %s6, %s4
  $region1: #{tpu_custom_call.1} parent=0
    #allocation3 [shape = 'u8[131072]{0}', space=vmem, size = 0x20000, scoped, tag = 'input window, operand 0']
    #allocation4 [shape = 's32[2]{0}', space=sflag, size = 0x8, scoped, tag = 'scoped memory for tpu_custom_call.1']
    #allocation5 [shape = 's32[2]{0}', space=sflag, size = 0x8, scoped, tag = 'scoped memory for tpu_custom_call.1']
    #allocation6 [shape = 'u8[524288]{0}', space=vmem, size = 0x80000, scoped, tag = 'input window, operand 1']
    #allocation7 [shape = 's32[2]{0}', space=sflag, size = 0x8, scoped, tag = 'scoped memory for tpu_custom_call.1']
    #allocation8 [shape = 'u8[1024]{0}', space=vmem, size = 0x400, scoped, tag = 'output window, operand 0, single buffered']
    %8 = vsyncpa [#allocation4], 0
    %s9 = scalar_lea.sflag [#allocation4], 1
    %10 = vsyncpa %s9, 0
    %11 = vsyncpa [#allocation7], 0
    %s12 = scalar_lea.sflag [#allocation7], 1
    %13 = vsyncpa %s12, 0
    %14 = vsyncpa [#allocation5], 0
    loop: start=0, step=1, limit=6
    $region2: #{tpu_custom_call.1} parent=1 // loop_pre_header
      _
    $region3: #{tpu_custom_call.1} parent=1 // loop_header
      %s16 = sphi 0, %s20
      %p17 = scmp.ge.s32.totalorder %s16, 6
      %s23 = sphi 0, %s35
      %s24 = sphi 0, %s31
      %s25 = sphi 0, %s23
      %s26 = sphi 0, %s24
      %s27 = sphi 0, %s25
      %s28 = sphi 0, %s26
      %s40 = sphi 0, %s42
      %s43 = sphi 0, %s40
      %s44 = sphi 0, %s43
      %s60 = sphi 0, %s44
      %s66 = sphi 0, %s68
      %s69 = sphi 0, %s66
      %s70 = sphi 0, %s69
      %s86 = sphi 0, %s70
      %s90 = sphi 0, %s90
      %s92 = sphi 0, %s90
      %s93 = sphi 0, %s92
      %s107 = sphi 0, %s93
      %s113 = sphi 0, %s115
      %s116 = sphi 0, %s113
      %s117 = sphi 0, %s116
      %s133 = sphi 0, %s117
    $region4: #{tpu_custom_call.1} parent=1 // loop_header_branch
      %19 = sbr.rel (%p17) target = $region8
    $region5: #{tpu_custom_call.1} parent=1 // loop_body
      %s21 = ssub.s32 %s16, 1
      %s22 = ssub.s32 %s16, 2
      %s29 = sadd.s32 1, %s24
      %p30 = scmp.ge.s32.totalorder %s29, 4
      %s31 = scalar_select %p30, 0, %s29
      %s32 = sadd.s32 1, %s23
      %s33 = scalar_select %p30, %s32, %s23
      %p34 = scmp.ge.s32.totalorder %s33, 1
      %s35 = scalar_select %p34, 0, %s33
      %s36 = ssub.s32 %s23, %s35
      %s37 = ssub.s32 %s24, %s31
      %s38 = sor.u32 %s36, %s37
      %p39 = scmp.eq.s32.totalorder %s38, 0
      %s41 = sadd.s32 %s40, 1
      %s42 = scalar_select %p39, %s40, %s41
      %p45 = pneg %p39
      %p46 = scmp.eq.s32.totalorder %s16, 3
      %p47 = por %p45, %p46
      %p48 = scmp.ne.s32.totalorder %s40, %s43
      %p49 = scmp.eq.s32.totalorder %s16, 0
      %p50 = por %p48, %p49
      %p51 = scmp.ne.s32.totalorder %s40, %s43
      %p52 = scmp.eq.s32.totalorder %s21, 3
      %p53 = por %p51, %p52
      %p54 = scmp.ne.s32.totalorder %s43, %s44
      %p55 = scmp.eq.s32.totalorder %s21, 0
      %p56 = por %p54, %p55
      %p57 = scmp.ne.s32.totalorder %s43, %s44
      %p58 = scmp.eq.s32.totalorder %s22, 3
      %p59 = por %p57, %p58
      %p61 = scmp.ne.s32.totalorder %s44, %s60
      %p62 = scmp.eq.s32.totalorder %s22, 0
      %p63 = por %p61, %p62
      %s64 = ssub.s32 %s24, %s31
      %p65 = scmp.eq.s32.totalorder %s64, 0
      %s67 = sadd.s32 %s66, 1
      %s68 = scalar_select %p65, %s66, %s67
      %p71 = pneg %p65
      %p72 = scmp.eq.s32.totalorder %s16, 3
      %p73 = por %p71, %p72
      %p74 = scmp.ne.s32.totalorder %s66, %s69
      %p75 = scmp.eq.s32.totalorder %s16, 0
      %p76 = por %p74, %p75
      %p77 = scmp.ne.s32.totalorder %s66, %s69
      %p78 = scmp.eq.s32.totalorder %s21, 3
      %p79 = por %p77, %p78
      %p80 = scmp.ne.s32.totalorder %s69, %s70
      %p81 = scmp.eq.s32.totalorder %s21, 0
      %p82 = por %p80, %p81
      %p83 = scmp.ne.s32.totalorder %s69, %s70
      %p84 = scmp.eq.s32.totalorder %s22, 3
      %p85 = por %p83, %p84
      %p87 = scmp.ne.s32.totalorder %s70, %s86
      %p88 = scmp.eq.s32.totalorder %s22, 0
      %p89 = por %p87, %p88
      %s91 = sadd.s32 %s90, 1
      %p94 = scmp.eq.s32.totalorder %s16, 3
      %p95 = scmp.ne.s32.totalorder %s90, %s92
      %p96 = scmp.eq.s32.totalorder %s16, 0
      %p97 = por %p95, %p96
      %p98 = scmp.ne.s32.totalorder %s90, %s92
      %p99 = scmp.eq.s32.totalorder %s21, 3
      %p100 = por %p98, %p99
      %p101 = scmp.ne.s32.totalorder %s92, %s93
      %p102 = scmp.eq.s32.totalorder %s21, 0
      %p103 = por %p101, %p102
      %p104 = scmp.ne.s32.totalorder %s92, %s93
      %p105 = scmp.eq.s32.totalorder %s22, 3
      %p106 = por %p104, %p105
      %p108 = scmp.ne.s32.totalorder %s93, %s107
      %p109 = scmp.eq.s32.totalorder %s22, 0
      %p110 = por %p108, %p109
      %s111 = ssub.s32 %s23, %s35
      %p112 = scmp.eq.s32.totalorder %s111, 0
      %s114 = sadd.s32 %s113, 1
      %s115 = scalar_select %p112, %s113, %s114
      %p118 = pneg %p112
      %p119 = scmp.eq.s32.totalorder %s16, 3
      %p120 = por %p118, %p119
      %p121 = scmp.ne.s32.totalorder %s113, %s116
      %p122 = scmp.eq.s32.totalorder %s16, 0
      %p123 = por %p121, %p122
      %p124 = scmp.ne.s32.totalorder %s113, %s116
      %p125 = scmp.eq.s32.totalorder %s21, 3
      %p126 = por %p124, %p125
      %p127 = scmp.ne.s32.totalorder %s116, %s117
      %p128 = scmp.eq.s32.totalorder %s21, 0
      %p129 = por %p127, %p128
      %p130 = scmp.ne.s32.totalorder %s116, %s117
      %p131 = scmp.eq.s32.totalorder %s22, 3
      %p132 = por %p130, %p131
      %p134 = scmp.ne.s32.totalorder %s117, %s133
      %p135 = scmp.eq.s32.totalorder %s22, 0
      %p136 = por %p134, %p135
      %p137 = scmp.le.s32.totalorder 1, %s16
      %p138 = scmp.lt.s32.totalorder %s16, 5
      %p139 = pnand %p137, %p138
      %p140 = pneg %p139
      // Predicated region
      $region9: #{tpu_custom_call.1} parent=5 // pred_check
        _
      $region10: #{tpu_custom_call.1} parent=5 // pred_check_branch
        %142 = sbr.rel (%p139) target = $region12
      $region11: #{tpu_custom_call.1} parent=5 // pred_region
        %s143 = ssub.s32 %s16, 1
        // Predicated region
        $region13: #{tpu_custom_call.1} parent=11 // pred_check
          %p144 = pneg %p103
        $region14: #{tpu_custom_call.1} parent=11 // pred_check_branch
          %146 = sbr.rel (%p144) target = $region16
        $region15: #{tpu_custom_call.1} parent=11 // pred_region
          _
        $region16: #{tpu_custom_call.1} parent=11 // pred_fallthru
          _
      $region12: #{tpu_custom_call.1} parent=5 // pred_fallthru
        _
      %p147 = scmp.lt.s32.totalorder %s16, 4
      // Predicated region
      $region17: #{tpu_custom_call.1} parent=5 // pred_check
        %p148 = pneg %p147
      $region18: #{tpu_custom_call.1} parent=5 // pred_check_branch
        %150 = sbr.rel (%p148) target = $region20
      $region19: #{tpu_custom_call.1} parent=5 // pred_region
        // Predicated region
        $region21: #{tpu_custom_call.1} parent=19 // pred_check
          %p151 = pneg %p50
        $region22: #{tpu_custom_call.1} parent=19 // pred_check_branch
          %153 = sbr.rel (%p151) target = $region24
        $region23: #{tpu_custom_call.1} parent=19 // pred_region
          %s154 = sand.u32 %s40, 1
          %s155 = scalar_lea.sflag [#allocation4], %s154
          %s156 = sand.u32 %s40, 1
          %s157 = smul.addr %s156, 128
          %s158 = scalar_lea.vmem [#allocation3], %s157
          %s159 = smul.u32 4, %s23
          %s160 = smul.u32 4, %s24
          %s162 = ssub.s32 2048, 2048
          %163 = vsyncadd %s155, %s162
          %s164 = smul.addr %s159, 16
          %s165 = sadd.s32 %s160, %s164
          %s166 = smul.addr %s165, 128
          %s167 = scalar_lea.hbm %s0, %s166
          %s168 = sshll.u32 %s158, 4
          %s169 = int_to_ptr.vmem [resolvable:$true] %s168
          %174 = dma.hbm_to_vmem [thread:$0]  %s167, 2048, %s169, %s155, 2048, 512, 32
        $region24: #{tpu_custom_call.1} parent=19 // pred_fallthru
          _
        // Predicated region
        $region25: #{tpu_custom_call.1} parent=19 // pred_check
          %p175 = pneg %p76
        $region26: #{tpu_custom_call.1} parent=19 // pred_check_branch
          %177 = sbr.rel (%p175) target = $region28
        $region27: #{tpu_custom_call.1} parent=19 // pred_region
          %s178 = sand.u32 %s66, 1
          %s179 = scalar_lea.sflag [#allocation7], %s178
          %s180 = sand.u32 %s66, 1
          %s181 = smul.addr %s180, 512
          %s182 = scalar_lea.vmem [#allocation6], %s181
          %s183 = smul.u32 64, %s24
          %s185 = ssub.s32 8192, 8192
          %186 = vsyncadd %s179, %s185
          %s187 = smul.addr %s183, 128
          %s188 = scalar_lea.hbm %s1, %s187
          %s189 = sshll.u32 %s182, 4
          %s190 = int_to_ptr.vmem [resolvable:$true] %s189
          %195 = dma.hbm_to_vmem [thread:$0]  %s188, 8192, %s190, %s179, 128, 128, 8
        $region28: #{tpu_custom_call.1} parent=19 // pred_fallthru
          _
      $region20: #{tpu_custom_call.1} parent=5 // pred_fallthru
        _
      %p196 = scmp.le.s32.totalorder 1, %s16
      %p197 = scmp.lt.s32.totalorder %s16, 5
      %p198 = pnand %p196, %p197
      %p199 = pneg %p198
      // Predicated region
      $region29: #{tpu_custom_call.1} parent=5 // pred_check
        _
      $region30: #{tpu_custom_call.1} parent=5 // pred_check_branch
        %201 = sbr.rel (%p198) target = $region32
      $region31: #{tpu_custom_call.1} parent=5 // pred_region
        %s202 = ssub.s32 %s16, 1
        %s203 = sand.u32 %s43, 1
        %s204 = scalar_lea.sflag [#allocation4], %s203
        %s205 = sand.u32 %s43, 1
        %s206 = smul.addr %s205, 128
        %s207 = scalar_lea.vmem [#allocation3], %s206
        // Predicated region
        $region33: #{tpu_custom_call.1} parent=31 // pred_check
          %p208 = pneg %p56
        $region34: #{tpu_custom_call.1} parent=31 // pred_check_branch
          %210 = sbr.rel (%p208) target = $region36
        $region35: #{tpu_custom_call.1} parent=31 // pred_region
          %211 = dma.done %s204, 2048
        $region36: #{tpu_custom_call.1} parent=31 // pred_fallthru
          _
        %s212 = sand.u32 %s69, 1
        %s213 = scalar_lea.sflag [#allocation7], %s212
        %s214 = sand.u32 %s69, 1
        %s215 = smul.addr %s214, 512
        %s216 = scalar_lea.vmem [#allocation6], %s215
        // Predicated region
        $region37: #{tpu_custom_call.1} parent=31 // pred_check
          %p217 = pneg %p82
        $region38: #{tpu_custom_call.1} parent=31 // pred_check_branch
          %219 = sbr.rel (%p217) target = $region40
        $region39: #{tpu_custom_call.1} parent=31 // pred_region
          %220 = dma.done %s213, 8192
        $region40: #{tpu_custom_call.1} parent=31 // pred_fallthru
          _
        %s221 = sand.u32 %s43, 1
        %s222 = scalar_lea.sflag [#allocation4], %s221
        %s223 = sand.u32 %s43, 1
        %s224 = smul.addr %s223, 128
        %s225 = scalar_lea.vmem [#allocation3], %s224
        %p226 = pneg %p56
        %p227 = pneg %p53
        %s228 = sand.u32 %s69, 1
        %s229 = scalar_lea.sflag [#allocation7], %s228
        %s230 = sand.u32 %s69, 1
        %s231 = smul.addr %s230, 512
        %s232 = scalar_lea.vmem [#allocation6], %s231
        %p233 = pneg %p82
        %p234 = pneg %p79
        %p235 = pneg %p103
        %p236 = pneg %p100
        %p237 = pneg %p129
        %p238 = pneg %p126
        %s239 = smul.u32 4, %s25
        %s240 = smul.u32 4, %s26
        %s241 = smul.u32 64, %s26
        %p242 = scmp.eq.s32.totalorder %s26, 0
        // Predicated region
        $region41: #{tpu_custom_call.1} parent=31 // pred_check
          %p243 = pneg %p242
        $region42: #{tpu_custom_call.1} parent=31 // pred_check_branch
          %245 = sbr.rel (%p243) target = $region44
        $region43: #{tpu_custom_call.1} parent=31 // pred_region
          %246 = vst [vmem:[#allocation2] sm:$0xff] 0.0
          %247 = vst [vmem:[#allocation2 + $0x8] sm:$0xff] 0.0
          %248 = vst [vmem:[#allocation2 + $0x10] sm:$0xff] 0.0
          %249 = vst [vmem:[#allocation2 + $0x18] sm:$0xff] 0.0
        $region44: #{tpu_custom_call.1} parent=31 // pred_fallthru
          _
        %v250 = vld [vmem:[#allocation2] sm:$0xff]
        %v251 = vld [vmem:[#allocation2 + $0x8] sm:$0xff]
        %v252 = vld [vmem:[#allocation2 + $0x10] sm:$0xff]
        %v253 = vld [vmem:[#allocation2 + $0x18] sm:$0xff]
        %v254 = vld [vmem:[%s207] sm:$0xff]
        %v255 = vld [vmem:[%s207 + $0x8] sm:$0xff]
        %v256 = vld [vmem:[%s207 + $0x10] sm:$0xff]
        %v257 = vld [vmem:[%s207 + $0x18] sm:$0xff]
        %v258 = vld [vmem:[%s207 + $0x20] sm:$0xff]
        %v259 = vld [vmem:[%s207 + $0x28] sm:$0xff]
        %v260 = vld [vmem:[%s207 + $0x30] sm:$0xff]
        %v261 = vld [vmem:[%s207 + $0x38] sm:$0xff]
        %v262 = vld [vmem:[%s207 + $0x40] sm:$0xff]
        %v263 = vld [vmem:[%s207 + $0x48] sm:$0xff]
        %v264 = vld [vmem:[%s207 + $0x50] sm:$0xff]
        %v265 = vld [vmem:[%s207 + $0x58] sm:$0xff]
        %v266 = vld [vmem:[%s207 + $0x60] sm:$0xff]
        %v267 = vld [vmem:[%s207 + $0x68] sm:$0xff]
        %v268 = vld [vmem:[%s207 + $0x70] sm:$0xff]
        %v269 = vld [vmem:[%s207 + $0x78] sm:$0xff]
        %v270 = vld [vmem:[%s216] sm:$0xff]
        %v271 = vld [vmem:[%s216 + $0x8] sm:$0xff]
        %v272 = vld [vmem:[%s216 + $0x10] sm:$0xff]
        %v273 = vld [vmem:[%s216 + $0x18] sm:$0xff]
        %v274 = vld [vmem:[%s216 + $0x20] sm:$0xff]
        %v275 = vld [vmem:[%s216 + $0x28] sm:$0xff]
        %v276 = vld [vmem:[%s216 + $0x30] sm:$0xff]
        %v277 = vld [vmem:[%s216 + $0x38] sm:$0xff]
        %v278 = vld [vmem:[%s216 + $0x40] sm:$0xff]
        %v279 = vld [vmem:[%s216 + $0x48] sm:$0xff]
        %v280 = vld [vmem:[%s216 + $0x50] sm:$0xff]
        %v281 = vld [vmem:[%s216 + $0x58] sm:$0xff]
        %v282 = vld [vmem:[%s216 + $0x60] sm:$0xff]
        %v283 = vld [vmem:[%s216 + $0x68] sm:$0xff]
        %v284 = vld [vmem:[%s216 + $0x70] sm:$0xff]
        %v285 = vld [vmem:[%s216 + $0x78] sm:$0xff]
        %v286 = vld [vmem:[%s216 + $0x80] sm:$0xff]
        %v287 = vld [vmem:[%s216 + $0x88] sm:$0xff]
        %v288 = vld [vmem:[%s216 + $0x90] sm:$0xff]
        %v289 = vld [vmem:[%s216 + $0x98] sm:$0xff]
        %v290 = vld [vmem:[%s216 + $0xa0] sm:$0xff]
        %v291 = vld [vmem:[%s216 + $0xa8] sm:$0xff]
        %v292 = vld [vmem:[%s216 + $0xb0] sm:$0xff]
        %v293 = vld [vmem:[%s216 + $0xb8] sm:$0xff]
        %v294 = vld [vmem:[%s216 + $0xc0] sm:$0xff]
        %v295 = vld [vmem:[%s216 + $0xc8] sm:$0xff]
        %v296 = vld [vmem:[%s216 + $0xd0] sm:$0xff]
        %v297 = vld [vmem:[%s216 + $0xd8] sm:$0xff]
        %v298 = vld [vmem:[%s216 + $0xe0] sm:$0xff]
        %v299 = vld [vmem:[%s216 + $0xe8] sm:$0xff]
        %v300 = vld [vmem:[%s216 + $0xf0] sm:$0xff]
        %v301 = vld [vmem:[%s216 + $0xf8] sm:$0xff]
        %v302 = vld [vmem:[%s216 + $0x100] sm:$0xff]
        %v303 = vld [vmem:[%s216 + $0x108] sm:$0xff]
        %v304 = vld [vmem:[%s216 + $0x110] sm:$0xff]
        %v305 = vld [vmem:[%s216 + $0x118] sm:$0xff]
        %v306 = vld [vmem:[%s216 + $0x120] sm:$0xff]
        %v307 = vld [vmem:[%s216 + $0x128] sm:$0xff]
        %v308 = vld [vmem:[%s216 + $0x130] sm:$0xff]
        %v309 = vld [vmem:[%s216 + $0x138] sm:$0xff]
        %v310 = vld [vmem:[%s216 + $0x140] sm:$0xff]
        %v311 = vld [vmem:[%s216 + $0x148] sm:$0xff]
        %v312 = vld [vmem:[%s216 + $0x150] sm:$0xff]
        %v313 = vld [vmem:[%s216 + $0x158] sm:$0xff]
        %v314 = vld [vmem:[%s216 + $0x160] sm:$0xff]
        %v315 = vld [vmem:[%s216 + $0x168] sm:$0xff]
        %v316 = vld [vmem:[%s216 + $0x170] sm:$0xff]
        %v317 = vld [vmem:[%s216 + $0x178] sm:$0xff]
        %v318 = vld [vmem:[%s216 + $0x180] sm:$0xff]
        %v319 = vld [vmem:[%s216 + $0x188] sm:$0xff]
        %v320 = vld [vmem:[%s216 + $0x190] sm:$0xff]
        %v321 = vld [vmem:[%s216 + $0x198] sm:$0xff]
        %v322 = vld [vmem:[%s216 + $0x1a0] sm:$0xff]
        %v323 = vld [vmem:[%s216 + $0x1a8] sm:$0xff]
        %v324 = vld [vmem:[%s216 + $0x1b0] sm:$0xff]
        %v325 = vld [vmem:[%s216 + $0x1b8] sm:$0xff]
        %v326 = vld [vmem:[%s216 + $0x1c0] sm:$0xff]
        %v327 = vld [vmem:[%s216 + $0x1c8] sm:$0xff]
        %v328 = vld [vmem:[%s216 + $0x1d0] sm:$0xff]
        %v329 = vld [vmem:[%s216 + $0x1d8] sm:$0xff]
        %v330 = vld [vmem:[%s216 + $0x1e0] sm:$0xff]
        %v331 = vld [vmem:[%s216 + $0x1e8] sm:$0xff]
        %v332 = vld [vmem:[%s216 + $0x1f0] sm:$0xff]
        %v333 = vld [vmem:[%s216 + $0x1f8] sm:$0xff]
        %334 = vmatprep.subr.mxu0 0.0
        %335 = vmatpush1.msra.mxu0 %v270
        %336 = vmatprep.subr.mxu0 0.0
        %337 = vmatpush1.msra.mxu0 %v271
        %338 = vmatprep.subr.mxu0 0.0
        %339 = vmatpush1.msra.mxu0 %v272
        %340 = vmatprep.subr.mxu0 0.0
        %341 = vmatpush1.msra.mxu0 %v273
        %342 = vmatprep.subr.mxu0 0.0
        %343 = vmatpush1.msra.mxu0 %v274
        %344 = vmatprep.subr.mxu0 0.0
        %345 = vmatpush1.msra.mxu0 %v275
        %346 = vmatprep.subr.mxu0 0.0
        %347 = vmatpush1.msra.mxu0 %v276
        %348 = vmatprep.subr.mxu0 0.0
        %349 = vmatpush1.msra.mxu0 %v277
        %350 = vmatprep.subr.mxu0 0.0
        %351 = vmatpush1.msra.mxu0 %v278
        %352 = vmatprep.subr.mxu0 0.0
        %353 = vmatpush1.msra.mxu0 %v279
        %354 = vmatprep.subr.mxu0 0.0
        %355 = vmatpush1.msra.mxu0 %v280
        %356 = vmatprep.subr.mxu0 0.0
        %357 = vmatpush1.msra.mxu0 %v281
        %358 = vmatprep.subr.mxu0 0.0
        %359 = vmatpush1.msra.mxu0 %v282
        %360 = vmatprep.subr.mxu0 0.0
        %361 = vmatpush1.msra.mxu0 %v283
        %362 = vmatprep.subr.mxu0 0.0
        %363 = vmatpush1.msra.mxu0 %v284
        %364 = vmatprep.subr.mxu0 0.0
        %365 = vmatpush1.msra.mxu0 %v285
        %366 = vmatprep.subr.mxu0 0.0
        %367 = vmatpush1.msra.mxu0 %v286
        %368 = vmatprep.subr.mxu0 0.0
        %369 = vmatpush1.msra.mxu0 %v287
        %370 = vmatprep.subr.mxu0 0.0
        %371 = vmatpush1.msra.mxu0 %v288
        %372 = vmatprep.subr.mxu0 0.0
        %373 = vmatpush1.msra.mxu0 %v289
        %374 = vmatprep.subr.mxu0 0.0
        %375 = vmatpush1.msra.mxu0 %v290
        %376 = vmatprep.subr.mxu0 0.0
        %377 = vmatpush1.msra.mxu0 %v291
        %378 = vmatprep.subr.mxu0 0.0
        %379 = vmatpush1.msra.mxu0 %v292
        %380 = vmatprep.subr.mxu0 0.0
        %381 = vmatpush1.msra.mxu0 %v293
        %382 = vmatprep.subr.mxu0 0.0
        %383 = vmatpush1.msra.mxu0 %v294
        %384 = vmatprep.subr.mxu0 0.0
        %385 = vmatpush1.msra.mxu0 %v295
        %386 = vmatprep.subr.mxu0 0.0
        %387 = vmatpush1.msra.mxu0 %v296
        %388 = vmatprep.subr.mxu0 0.0
        %389 = vmatpush1.msra.mxu0 %v297
        %390 = vmatprep.subr.mxu0 0.0
        %391 = vmatpush1.msra.mxu0 %v298
        %392 = vmatprep.subr.mxu0 0.0
        %393 = vmatpush1.msra.mxu0 %v299
        %394 = vmatprep.subr.mxu0 0.0
        %395 = vmatpush1.msra.mxu0 %v300
        %396 = vmatprep.subr.mxu0 0.0
        %397 = vmatpush1.msra.mxu0 %v301
        %398 = vmatprep.mubr.f32.mxu0 %v255
        %399 = vmatmul.mubr.f32.gmra.mrb[0].mxu0 %v254
        %v400 = vpop.f32.mrb[0].mxu0
        %v401 = vadd.f32 0.0, %v400
        %v402 = vpop.f32.mrb[0].mxu0
        %403 = vmatprep.mubr.f32.mxu0 %v259
        %404 = vmatmul.mubr.f32.gmra.mrb[0].mxu0 %v258
        %v405 = vpop.f32.mrb[0].mxu0
        %v406 = vadd.f32 0.0, %v405
        %v407 = vpop.f32.mrb[0].mxu0
        %408 = vmatprep.mubr.f32.mxu0 %v263
        %409 = vmatmul.mubr.f32.gmra.mrb[0].mxu0 %v262
        %v410 = vpop.f32.mrb[0].mxu0
        %v411 = vadd.f32 0.0, %v410
        %v412 = vpop.f32.mrb[0].mxu0
        %413 = vmatprep.mubr.f32.mxu0 %v267
        %414 = vmatmul.mubr.f32.gmra.mrb[0].mxu0 %v266
        %v415 = vpop.f32.mrb[0].mxu0
        %v416 = vadd.f32 0.0, %v415
        %v417 = vpop.f32.mrb[0].mxu0
        %418 = vdwg.mxu0
        %419 = vmatprep.subr.mxu0 0.0
        %420 = vmatpush1.msra.mxu0 %v302
        %421 = vmatprep.subr.mxu0 0.0
        %422 = vmatpush1.msra.mxu0 %v303
        %423 = vmatprep.subr.mxu0 0.0
        %424 = vmatpush1.msra.mxu0 %v304
        %425 = vmatprep.subr.mxu0 0.0
        %426 = vmatpush1.msra.mxu0 %v305
        %427 = vmatprep.subr.mxu0 0.0
        %428 = vmatpush1.msra.mxu0 %v306
        %429 = vmatprep.subr.mxu0 0.0
        %430 = vmatpush1.msra.mxu0 %v307
        %431 = vmatprep.subr.mxu0 0.0
        %432 = vmatpush1.msra.mxu0 %v308
        %433 = vmatprep.subr.mxu0 0.0
        %434 = vmatpush1.msra.mxu0 %v309
        %435 = vmatprep.subr.mxu0 0.0
        %436 = vmatpush1.msra.mxu0 %v310
        %437 = vmatprep.subr.mxu0 0.0
        %438 = vmatpush1.msra.mxu0 %v311
        %439 = vmatprep.subr.mxu0 0.0
        %440 = vmatpush1.msra.mxu0 %v312
        %441 = vmatprep.subr.mxu0 0.0
        %442 = vmatpush1.msra.mxu0 %v313
        %443 = vmatprep.subr.mxu0 0.0
        %444 = vmatpush1.msra.mxu0 %v314
        %445 = vmatprep.subr.mxu0 0.0
        %446 = vmatpush1.msra.mxu0 %v315
        %447 = vmatprep.subr.mxu0 0.0
        %448 = vmatpush1.msra.mxu0 %v316
        %449 = vmatprep.subr.mxu0 0.0
        %450 = vmatpush1.msra.mxu0 %v317
        %451 = vmatprep.subr.mxu0 0.0
        %452 = vmatpush1.msra.mxu0 %v318
        %453 = vmatprep.subr.mxu0 0.0
        %454 = vmatpush1.msra.mxu0 %v319
        %455 = vmatprep.subr.mxu0 0.0
        %456 = vmatpush1.msra.mxu0 %v320
        %457 = vmatprep.subr.mxu0 0.0
        %458 = vmatpush1.msra.mxu0 %v321
        %459 = vmatprep.subr.mxu0 0.0
        %460 = vmatpush1.msra.mxu0 %v322
        %461 = vmatprep.subr.mxu0 0.0
        %462 = vmatpush1.msra.mxu0 %v323
        %463 = vmatprep.subr.mxu0 0.0
        %464 = vmatpush1.msra.mxu0 %v324
        %465 = vmatprep.subr.mxu0 0.0
        %466 = vmatpush1.msra.mxu0 %v325
        %467 = vmatprep.subr.mxu0 0.0
        %468 = vmatpush1.msra.mxu0 %v326
        %469 = vmatprep.subr.mxu0 0.0
        %470 = vmatpush1.msra.mxu0 %v327
        %471 = vmatprep.subr.mxu0 0.0
        %472 = vmatpush1.msra.mxu0 %v328
        %473 = vmatprep.subr.mxu0 0.0
        %474 = vmatpush1.msra.mxu0 %v329
        %475 = vmatprep.subr.mxu0 0.0
        %476 = vmatpush1.msra.mxu0 %v330
        %477 = vmatprep.subr.mxu0 0.0
        %478 = vmatpush1.msra.mxu0 %v331
        %479 = vmatprep.subr.mxu0 0.0
        %480 = vmatpush1.msra.mxu0 %v332
        %481 = vmatprep.subr.mxu0 0.0
        %482 = vmatpush1.msra.mxu0 %v333
        %483 = vmatprep.mubr.f32.mxu0 %v257
        %484 = vmatmul.mubr.f32.gmra.mrb[0].mxu0 %v256
        %v485 = vpop.f32.mrb[0].mxu0
        %v486 = vadd.f32 %v401, %v485
        %v487 = vpop.f32.mrb[0].mxu0
        %488 = vmatprep.mubr.f32.mxu0 %v261
        %489 = vmatmul.mubr.f32.gmra.mrb[0].mxu0 %v260
        %v490 = vpop.f32.mrb[0].mxu0
        %v491 = vadd.f32 %v406, %v490
        %v492 = vpop.f32.mrb[0].mxu0
        %493 = vmatprep.mubr.f32.mxu0 %v265
        %494 = vmatmul.mubr.f32.gmra.mrb[0].mxu0 %v264
        %v495 = vpop.f32.mrb[0].mxu0
        %v496 = vadd.f32 %v411, %v495
        %v497 = vpop.f32.mrb[0].mxu0
        %498 = vmatprep.mubr.f32.mxu0 %v269
        %499 = vmatmul.mubr.f32.gmra.mrb[0].mxu0 %v268
        %v500 = vpop.f32.mrb[0].mxu0
        %v501 = vadd.f32 %v416, %v500
        %v502 = vpop.f32.mrb[0].mxu0
        %503 = vdwg.mxu0
        %v504 = vadd.f32 %v250, %v486
        %v505 = vadd.f32 %v251, %v491
        %v506 = vadd.f32 %v252, %v496
        %v507 = vadd.f32 %v253, %v501
        %508 = vst [vmem:[#allocation2] sm:$0xff] %v504
        %509 = vst [vmem:[#allocation2 + $0x8] sm:$0xff] %v505
        %510 = vst [vmem:[#allocation2 + $0x10] sm:$0xff] %v506
        %511 = vst [vmem:[#allocation2 + $0x18] sm:$0xff] %v507
        %p512 = scmp.eq.s32.totalorder %s26, 3
        // Predicated region
        $region45: #{tpu_custom_call.1} parent=31 // pred_check
          %p513 = pneg %p512
        $region46: #{tpu_custom_call.1} parent=31 // pred_check_branch
          %515 = sbr.rel (%p513) target = $region48
        $region47: #{tpu_custom_call.1} parent=31 // pred_region
          %v516 = vld [vmem:[#allocation2] sm:$0xff]
          %v517 = vld [vmem:[#allocation2 + $0x8] sm:$0xff]
          %v518 = vld [vmem:[#allocation2 + $0x10] sm:$0xff]
          %v519 = vld [vmem:[#allocation2 + $0x18] sm:$0xff]
          %v520 = vadd.f32 %v516, %v517
          %v521 = vrot.slane %v520, 4
          %v522 = vadd.f32 %v520, %v521
          %v523 = vrot.slane %v522, 2
          %v524 = vadd.f32 %v522, %v523
          %v525 = vrot.slane %v524, 1
          %v526 = vadd.f32 %v524, %v525
          %v527 = vadd.f32 %v518, %v519
          %v528 = vrot.slane %v527, 4
          %v529 = vadd.f32 %v527, %v528
          %v530 = vrot.slane %v529, 2
          %v531 = vadd.f32 %v529, %v530
          %v532 = vrot.slane %v531, 1
          %v533 = vadd.f32 %v531, %v532
          %v534 = vld [vmem:[%s2] sm:$0x1]
          %v536 = vlaneseq
          %v537 = vshrl.u32 %v536, 7
          %v538 = vsub.s32 0, %v537
          %v539 = vrot.slane %v534, %v538
          %v541 = vadd.f32 %v526, %v539
          %v542 = vadd.f32 %v533, %v539
          %v545 = vrot.slane %v542, 7
          %vm546 = vcmask 1041409
          %v547 = vsel %vm546, %v545, %v541
          %549 = vst [vmem:[#allocation8] sm:$0x3] %v547
        $region48: #{tpu_custom_call.1} parent=31 // pred_fallthru
          _
        // Predicated region
        $region49: #{tpu_custom_call.1} parent=31 // pred_check
          %p550 = pneg %p126
        $region50: #{tpu_custom_call.1} parent=31 // pred_check_branch
          %552 = sbr.rel (%p550) target = $region52
        $region51: #{tpu_custom_call.1} parent=31 // pred_region
          %s554 = ssub.s32 32, 32
          %555 = vsyncadd [#allocation5], %s554
          %s556 = smul.addr %s25, 32
          %s557 = scalar_lea.hbm %s3, %s556
          %s559 = sshll.u32 [#allocation8], 4
          %s560 = int_to_ptr.vmem [resolvable:$true] %s559
          %562 = dma.vmem_to_hbm [thread:$0]  %s560, 32, %s557, [#allocation5]
        $region52: #{tpu_custom_call.1} parent=31 // pred_fallthru
          _
        // Predicated region
        $region53: #{tpu_custom_call.1} parent=31 // pred_check
          %p563 = pneg %p126
        $region54: #{tpu_custom_call.1} parent=31 // pred_check_branch
          %565 = sbr.rel (%p563) target = $region56
        $region55: #{tpu_custom_call.1} parent=31 // pred_region
          %566 = dma.done [#allocation5], 32
        $region56: #{tpu_custom_call.1} parent=31 // pred_fallthru
          _
      $region32: #{tpu_custom_call.1} parent=5 // pred_fallthru
        _
      %p567 = scmp.le.s32.totalorder 2, %s16
      // Predicated region
      $region57: #{tpu_custom_call.1} parent=5 // pred_check
        %p568 = pneg %p567
      $region58: #{tpu_custom_call.1} parent=5 // pred_check_branch
        %570 = sbr.rel (%p568) target = $region60
      $region59: #{tpu_custom_call.1} parent=5 // pred_region
        %s571 = ssub.s32 %s16, 2
      $region60: #{tpu_custom_call.1} parent=5 // pred_fallthru
        _
    $region6: #{tpu_custom_call.1} parent=1 // loop_footer
      %s20 = sadd.s32 1, %s16
    $region7: #{tpu_custom_call.1} parent=1 // loop_footer_branch
      %15 = sbr.rel target = $region3
    $region8: #{tpu_custom_call.1} parent=1 // loop_exit
      _
    %572 = vsyncpa [#allocation4], 1
    %s573 = scalar_lea.sflag [#allocation4], 1
    %574 = vsyncpa %s573, 1
    %575 = vsyncpa [#allocation7], 1
    %s576 = scalar_lea.sflag [#allocation7], 1
    %577 = vsyncpa %s576, 1
    %578 = vsyncpa [#allocation5], 1
    %s579 = scalar_lea.sflag [#allocation5], 1
    %580 = vsyncpa %s579, 1

</llo_original>
